<compile_context>
chip_gen: v7x
topology: tpu7x:2x2x1
jax: 0.10.0
libtpu: 0.0.40
codegen_flags: <defaults>
</compile_context>

<pallas_src>
import functools

import jax
import jax.numpy as jnp
from jax.experimental import pallas as pl
from jax.experimental.pallas import tpu as pltpu


def _round_up(x, m):
    return ((x + m - 1) // m) * m


def _cdiv(a, b):
    return -(-a // b)


def _cross_fusion_loss_kernel(o1_ref, o2_ref, o3_ref, tgt_ref, w_ref, out_ref,
                              acc_wl_ref, acc_w_ref, acc_sse_ref, *,
                              tile_n, tiles_per_core, n_rows):
    core = pl.program_id(0)
    step = pl.program_id(1)

    @pl.when(step == 0)
    def _init():
        acc_wl_ref[...] = jnp.zeros_like(acc_wl_ref)
        acc_w_ref[...] = jnp.zeros_like(acc_w_ref)
        acc_sse_ref[...] = jnp.zeros_like(acc_sse_ref)

    o1 = o1_ref[...].astype(jnp.float32)      # (TN, C)
    o2 = o2_ref[...].astype(jnp.float32)      # (TN, C)
    o3 = o3_ref[...].astype(jnp.float32)      # (TN, C)
    tgt = tgt_ref[...]                        # (TN, 1) int32
    w = w_ref[...].astype(jnp.float32)        # (1, C)
    tn, cdim = o1.shape

    # Intended (unclamped) global row ids of this tile.  Rows >= n_rows are
    # padding / phantom tiles and are masked to zero contribution.
    row0 = (core * tiles_per_core + step) * tile_n
    rows = row0 + jax.lax.broadcasted_iota(jnp.int32, (tn, 1), 0)
    valid = rows < n_rows                                               # (TN, 1)

    # ---- weighted cross-entropy partials (stable log-softmax on output1) ----
    row_max = jnp.max(o1, axis=-1, keepdims=True)                       # (TN, 1)
    shifted = o1 - row_max                                              # (TN, C)
    lse = jnp.log(jnp.sum(jnp.exp(shifted), axis=-1, keepdims=True))    # (TN, 1)

    class_ids = jax.lax.broadcasted_iota(jnp.int32, (tn, cdim), 1)      # (TN, C)
    onehot = (class_ids == tgt).astype(jnp.float32)                     # (TN, C)
    logit_t = jnp.sum(onehot * shifted, axis=-1, keepdims=True)         # (TN, 1)
    w_row = jnp.sum(onehot * w, axis=-1, keepdims=True)                 # (TN, 1)
    neg_wlogp = w_row * (lse - logit_t)                                 # (TN, 1)

    # ---- fused SSE partial covering both MSE terms ----
    d12 = o1 - o2
    d13 = o1 - o3
    sse_row = jnp.sum(d12 * d12 + d13 * d13, axis=-1, keepdims=True)    # (TN, 1)

    # Vector accumulation into resident scratch; no per-step scalar reduction.
    zero = jnp.zeros_like(neg_wlogp)
    acc_wl_ref[...] += jnp.where(valid, neg_wlogp, zero)
    acc_w_ref[...] += jnp.where(valid, w_row, zero)
    acc_sse_ref[...] += jnp.where(valid, sse_row, zero)

    @pl.when(step == tiles_per_core - 1)
    def _finalize():
        wl = jnp.sum(acc_wl_ref[...])
        ws = jnp.sum(acc_w_ref[...])
        sse = jnp.sum(acc_sse_ref[...])
        sub = jax.lax.broadcasted_iota(jnp.int32, (8, 128), 0)
        vals = jnp.where(sub == 0, wl,
               jnp.where(sub == 1, ws,
               jnp.where(sub == 2, sse, 0.0)))
        out_ref[0] = vals                    # per-core partials, lane-dense tile


def cross_fusion_cnn_loss(output, target, weight, *, tile_n=None,
                          num_core_splits=2):
    """output = (output1, output2, output3), each (N, C); target (N,); weight (C,)."""
    o1, o2, o3 = output
    n, c = o1.shape
    assert o2.shape == (n, c) and o3.shape == (n, c)

    in_item = jnp.dtype(o1.dtype).itemsize
    lane_c = _round_up(c, 128)

    try:
        vmem_phys = int(pltpu.get_tpu_info().vmem_capacity_bytes)
    except Exception:
        vmem_phys = 64 * 1024 * 1024        # conservative (v7x per-TC VMEM)

    # Per-row VMEM footprint: double-buffered logit tiles + target column
    # (lane-padded), plus single-buffered f32 (tile_n, 1) accumulators.
    bytes_per_row = 2 * (3 * lane_c * in_item + 128 * 4) + 3 * 128 * 4
    working_budget = min(max(vmem_phys // 3, 8 * 1024 * 1024), 48 * 1024 * 1024)

    if tile_n is None:
        tile_n = working_budget // bytes_per_row
    tile_n = max(8, min(int(tile_n), 16384))
    tile_n = (tile_n // 8) * 8
    if n <= tile_n:
        tile_n = _round_up(n, 8)

    tiles_total = _cdiv(n, tile_n)
    num_splits = max(1, min(int(num_core_splits), tiles_total))
    tiles_per_core = _cdiv(tiles_total, num_splits)

    tgt2d = target.astype(jnp.int32).reshape(n, 1)
    w2d = weight.astype(jnp.float32).reshape(1, c)

    def tile_map(ci, si):
        t = ci * tiles_per_core + si
        # Clamp phantom tiles (from the core split) onto the last real block;
        # their rows are masked in-kernel so they contribute exactly zero.
        return (jnp.minimum(t, tiles_total - 1), 0)

    kernel = functools.partial(
        _cross_fusion_loss_kernel,
        tile_n=tile_n, tiles_per_core=tiles_per_core, n_rows=n)

    vmem_limit = int(min(vmem_phys * 3 // 4,
                         working_budget * 2 + (8 * 1024 * 1024)))

    cost = pl.CostEstimate(
        flops=int(12 * n * c),
        transcendentals=int(n * c + n),
        bytes_accessed=int(3 * n * c * in_item + n * 4 + c * 4
                           + num_splits * 8 * 128 * 4),
    )

    parts = pl.pallas_call(
        kernel,
        out_shape=jax.ShapeDtypeStruct((num_splits, 8, 128), jnp.float32),
        grid=(num_splits, tiles_per_core),
        in_specs=[
            pl.BlockSpec((tile_n, c), tile_map),          # output1 tile
            pl.BlockSpec((tile_n, c), tile_map),          # output2 tile
            pl.BlockSpec((tile_n, c), tile_map),          # output3 tile
            pl.BlockSpec((tile_n, 1), tile_map),          # target column tile
            pl.BlockSpec((1, c), lambda ci, si: (0, 0)),  # class weights (resident)
        ],
        out_specs=pl.BlockSpec((1, 8, 128), lambda ci, si: (ci, 0, 0)),
        scratch_shapes=[
            pltpu.VMEM((tile_n, 1), jnp.float32),   # sum_i w[t_i] * (-logp[t_i])
            pltpu.VMEM((tile_n, 1), jnp.float32),   # sum_i w[t_i]
            pltpu.VMEM((tile_n, 1), jnp.float32),   # SSE(o1-o2) + SSE(o1-o3)
        ],
        compiler_params=pltpu.CompilerParams(
            dimension_semantics=("parallel", "arbitrary"),
            vmem_limit_bytes=vmem_limit,
        ),
        cost_estimate=cost,
    )(o1, o2, o3, tgt2d, w2d)

    wl_tot = jnp.sum(parts[:, 0, 0])
    w_tot = jnp.sum(parts[:, 1, 0])     # NaN if zero, matching PyTorch behavior
    sse_tot = jnp.sum(parts[:, 2, 0])
    return wl_tot / w_tot + sse_tot / float(n * c)


def _reference_loss(output, target, weight):
    """Pure-JAX reference mirroring the PyTorch module."""
    o1, o2, o3 = [x.astype(jnp.float32) for x in output]
    logp = jax.nn.log_softmax(o1, axis=-1)
    n = o1.shape[0]
    lp_t = logp[jnp.arange(n), target]
    w_t = weight[target]
    loss1 = -jnp.sum(w_t * lp_t) / jnp.sum(w_t)
    loss2 = jnp.mean((o1 - o2) ** 2)
    loss3 = jnp.mean((o1 - o3) ** 2)
    return loss1 + loss2 + loss3


if __name__ == "__main__":
    key = jax.random.PRNGKey(0)

    def make_case(k, n, c, dtype=jnp.float32):
        k1, k2, k3, k4, k5 = jax.random.split(k, 5)
        out1 = jax.random.normal(k1, (n, c)).astype(dtype)
        out2 = jax.random.normal(k2, (n, c)).astype(dtype)
        out3 = jax.random.normal(k3, (n, c)).astype(dtype)
        tgt = jax.random.randint(k4, (n,), 0, c, dtype=jnp.int32)
        w = 0.5 + jax.random.uniform(k5, (c,), dtype=jnp.float32)
        return (out1, out2, out3), tgt, w

    k_a, k_b, k_c = jax.random.split(key, 3)

    # Case 1: N divisible by tile -> multi-step accumulation + 2-way core split.
    out, tgt, w = make_case(k_a, 64, 16)
    got = jax.block_until_ready(cross_fusion_cnn_loss(out, tgt, w, tile_n=16))
    ref = _reference_loss(out, tgt, w)
    assert jnp.allclose(got, ref, rtol=1e-5, atol=1e-5), (got, ref)

    # Case 2: ragged N -> partial tail tile + phantom tile masking, no padding copies.
    out, tgt, w = make_case(k_b, 37, 16)
    got = jax.block_until_ready(cross_fusion_cnn_loss(out, tgt, w, tile_n=16))
    ref = _reference_loss(out, tgt, w)
    assert jnp.allclose(got, ref, rtol=1e-5, atol=1e-5), (got, ref)

    # Case 3: auto tile sizing (single fat tile) with bf16 logits ingest.
    out, tgt, w = make_case(k_c, 48, 16, dtype=jnp.bfloat16)
    got = jax.block_until_ready(cross_fusion_cnn_loss(out, tgt, w))
    ref = _reference_loss(out, tgt, w)
    assert jnp.allclose(got, ref, rtol=1e-4, atol=1e-4), (got, ref)

    print("KERNEL_OK")
</pallas_src>

<mosaic_0001>
module attributes {stable_mosaic.version = 11 : i64} {
  func.func @_cross_fusion_loss_kernel(%arg0: i32, %arg1: i32, %arg2: memref<16x16xf32, #tpu.memory_space<vmem>>, %arg3: memref<16x16xf32, #tpu.memory_space<vmem>>, %arg4: memref<16x16xf32, #tpu.memory_space<vmem>>, %arg5: memref<16x1xi32, #tpu.memory_space<vmem>>, %arg6: memref<1x16xf32, #tpu.memory_space<vmem>>, %arg7: memref<1x8x128xf32, #tpu.memory_space<vmem>>, %arg8: memref<16x1xf32, #tpu.memory_space<vmem>>, %arg9: memref<16x1xf32, #tpu.memory_space<vmem>>, %arg10: memref<16x1xf32, #tpu.memory_space<vmem>>) attributes {dimension_semantics = [#tpu.dimension_semantics<parallel>, #tpu.dimension_semantics<arbitrary>], iteration_bounds = array<i64: 2, 2>, scalar_prefetch = 0 : i64, scratch_operands = 3 : i64, tpu.core_type = #tpu.core_type<tc>, window_params = [{transform_indices = @transform_0, window_bounds = array<i64: 16, 16>}, {transform_indices = @transform_1, window_bounds = array<i64: 16, 16>}, {transform_indices = @transform_2, window_bounds = array<i64: 16, 16>}, {transform_indices = @transform_3, window_bounds = array<i64: 16, 1>}, {pipeline_mode = #tpu.pipeline_mode<synchronous>, transform_indices = @transform_4, window_bounds = array<i64: 1, 16>}, {transform_indices = @transform_5, window_bounds = array<i64: 1, 8, 128>}]} {
    %c0_i32 = arith.constant 0 : i32
    %0 = arith.cmpi eq, %arg1, %c0_i32 : i32
    %1 = arith.extui %0 : i1 to i32
    %c0_i32_0 = arith.constant 0 : i32
    %2 = arith.cmpi ne, %1, %c0_i32_0 : i32
    scf.if %2 {
      %cst_28 = arith.constant 0.000000e+00 : f32
      %61 = vector.broadcast %cst_28 : f32 to vector<16x1xf32>
      %c0_29 = arith.constant 0 : index
      %c0_30 = arith.constant 0 : index
      %62 = vector.load %arg8[%c0_29, %c0_30] : memref<16x1xf32, #tpu.memory_space<vmem>>, vector<16x1xf32>
      tpu.vector_store %arg8[%c0_29, %c0_30], %61 {strides = array<i32>} : memref<16x1xf32, #tpu.memory_space<vmem>>, vector<16x1xf32>,
      %cst_31 = arith.constant 0.000000e+00 : f32
      %63 = vector.broadcast %cst_31 : f32 to vector<16x1xf32>
      %c0_32 = arith.constant 0 : index
      %c0_33 = arith.constant 0 : index
      %64 = vector.load %arg9[%c0_32, %c0_33] : memref<16x1xf32, #tpu.memory_space<vmem>>, vector<16x1xf32>
      tpu.vector_store %arg9[%c0_32, %c0_33], %63 {strides = array<i32>} : memref<16x1xf32, #tpu.memory_space<vmem>>, vector<16x1xf32>,
      %cst_34 = arith.constant 0.000000e+00 : f32
      %65 = vector.broadcast %cst_34 : f32 to vector<16x1xf32>
      %c0_35 = arith.constant 0 : index
      %c0_36 = arith.constant 0 : index
      %66 = vector.load %arg10[%c0_35, %c0_36] : memref<16x1xf32, #tpu.memory_space<vmem>>, vector<16x1xf32>
      tpu.vector_store %arg10[%c0_35, %c0_36], %65 {strides = array<i32>} : memref<16x1xf32, #tpu.memory_space<vmem>>, vector<16x1xf32>,
    } else {
    }
    %c0 = arith.constant 0 : index
    %c0_1 = arith.constant 0 : index
    %3 = vector.load %arg2[%c0, %c0_1] : memref<16x16xf32, #tpu.memory_space<vmem>>, vector<16x16xf32>
    %c0_2 = arith.constant 0 : index
    %c0_3 = arith.constant 0 : index
    %4 = vector.load %arg3[%c0_2, %c0_3] : memref<16x16xf32, #tpu.memory_space<vmem>>, vector<16x16xf32>
    %c0_4 = arith.constant 0 : index
    %c0_5 = arith.constant 0 : index
    %5 = vector.load %arg4[%c0_4, %c0_5] : memref<16x16xf32, #tpu.memory_space<vmem>>, vector<16x16xf32>
    %c0_6 = arith.constant 0 : index
    %c0_7 = arith.constant 0 : index
    %6 = vector.load %arg5[%c0_6, %c0_7] : memref<16x1xi32, #tpu.memory_space<vmem>>, vector<16x1xi32>
    %c0_8 = arith.constant 0 : index
    %c0_9 = arith.constant 0 : index
    %7 = vector.load %arg6[%c0_8, %c0_9] : memref<1x16xf32, #tpu.memory_space<vmem>>, vector<1x16xf32>
    %c2_i32 = arith.constant 2 : i32
    %8 = arith.muli %arg0, %c2_i32 : i32
    %9 = arith.addi %8, %arg1 : i32
    %c16_i32 = arith.constant 16 : i32
    %10 = arith.muli %9, %c16_i32 : i32
    %11 = tpu.iota {dimensions = array<i32: 0>} : vector<16x1xi32>
    %12 = vector.broadcast %10 : i32 to vector<16x1xi32>
    %13 = arith.addi %12, %11 : vector<16x1xi32>
    %c64_i32 = arith.constant 64 : i32
    %14 = vector.broadcast %c64_i32 : i32 to vector<16x1xi32>
    %15 = arith.cmpi slt, %13, %14 : vector<16x1xi32>
    %cst = arith.constant dense<0xFF800000> : vector<16xf32>
    %16 = vector.multi_reduction <maximumf>, %3, %cst [1] : vector<16x16xf32> to vector<16xf32>
    %17 = vector.shape_cast %16 : vector<16xf32> to vector<16x1xf32>
    %18 = vector.broadcast %17 : vector<16x1xf32> to vector<16x16xf32>
    %19 = arith.subf %3, %18 : vector<16x16xf32>
    %20 = math.exp %19 : vector<16x16xf32>
    %cst_10 = arith.constant dense<0.000000e+00> : vector<16xf32>
    %21 = vector.multi_reduction <add>, %20, %cst_10 [1] : vector<16x16xf32> to vector<16xf32>
    %22 = vector.shape_cast %21 : vector<16xf32> to vector<16x1xf32>
    %23 = math.log %22 : vector<16x1xf32>
    %24 = tpu.iota {dimensions = array<i32: 1>} : vector<16x16xi32>
    %25 = vector.broadcast %6 : vector<16x1xi32> to vector<16x16xi32>
    %26 = arith.cmpi eq, %24, %25 : vector<16x16xi32>
    %27 = arith.extui %26 : vector<16x16xi1> to vector<16x16xi32>
    %28 = arith.sitofp %27 : vector<16x16xi32> to vector<16x16xf32>
    %29 = arith.mulf %28, %19 : vector<16x16xf32>
    %cst_11 = arith.constant dense<0.000000e+00> : vector<16xf32>
    %30 = vector.multi_reduction <add>, %29, %cst_11 [1] : vector<16x16xf32> to vector<16xf32>
    %31 = vector.shape_cast %30 : vector<16xf32> to vector<16x1xf32>
    %32 = vector.broadcast %7 : vector<1x16xf32> to vector<16x16xf32>
    %33 = arith.mulf %28, %32 : vector<16x16xf32>
    %cst_12 = arith.constant dense<0.000000e+00> : vector<16xf32>
    %34 = vector.multi_reduction <add>, %33, %cst_12 [1] : vector<16x16xf32> to vector<16xf32>
    %35 = vector.shape_cast %34 : vector<16xf32> to vector<16x1xf32>
    %36 = arith.subf %23, %31 : vector<16x1xf32>
    %37 = arith.mulf %35, %36 : vector<16x1xf32>
    %38 = arith.subf %3, %4 : vector<16x16xf32>
    %39 = arith.subf %3, %5 : vector<16x16xf32>
    %40 = arith.mulf %38, %38 : vector<16x16xf32>
    %41 = arith.mulf %39, %39 : vector<16x16xf32>
    %42 = arith.addf %40, %41 : vector<16x16xf32>
    %cst_13 = arith.constant dense<0.000000e+00> : vector<16xf32>
    %43 = vector.multi_reduction <add>, %42, %cst_13 [1] : vector<16x16xf32> to vector<16xf32>
    %44 = vector.shape_cast %43 : vector<16xf32> to vector<16x1xf32>
    %cst_14 = arith.constant 0.000000e+00 : f32
    %45 = vector.broadcast %cst_14 : f32 to vector<16x1xf32>
    %c0_15 = arith.constant 0 : index
    %c0_16 = arith.constant 0 : index
    %46 = vector.load %arg8[%c0_15, %c0_16] : memref<16x1xf32, #tpu.memory_space<vmem>>, vector<16x1xf32>
    %47 = arith.select %15, %37, %45 : vector<16x1xi1>, vector<16x1xf32>
    %48 = arith.addf %46, %47 : vector<16x1xf32>
    %c0_17 = arith.constant 0 : index
    %c0_18 = arith.constant 0 : index
    %49 = vector.load %arg8[%c0_17, %c0_18] : memref<16x1xf32, #tpu.memory_space<vmem>>, vector<16x1xf32>
    tpu.vector_store %arg8[%c0_17, %c0_18], %48 {strides = array<i32>} : memref<16x1xf32, #tpu.memory_space<vmem>>, vector<16x1xf32>,
    %c0_19 = arith.constant 0 : index
    %c0_20 = arith.constant 0 : index
    %50 = vector.load %arg9[%c0_19, %c0_20] : memref<16x1xf32, #tpu.memory_space<vmem>>, vector<16x1xf32>
    %51 = arith.select %15, %35, %45 : vector<16x1xi1>, vector<16x1xf32>
    %52 = arith.addf %50, %51 : vector<16x1xf32>
    %c0_21 = arith.constant 0 : index
    %c0_22 = arith.constant 0 : index
    %53 = vector.load %arg9[%c0_21, %c0_22] : memref<16x1xf32, #tpu.memory_space<vmem>>, vector<16x1xf32>
    tpu.vector_store %arg9[%c0_21, %c0_22], %52 {strides = array<i32>} : memref<16x1xf32, #tpu.memory_space<vmem>>, vector<16x1xf32>,
    %c0_23 = arith.constant 0 : index
    %c0_24 = arith.constant 0 : index
    %54 = vector.load %arg10[%c0_23, %c0_24] : memref<16x1xf32, #tpu.memory_space<vmem>>, vector<16x1xf32>
    %55 = arith.select %15, %44, %45 : vector<16x1xi1>, vector<16x1xf32>
    %56 = arith.addf %54, %55 : vector<16x1xf32>
    %c0_25 = arith.constant 0 : index
    %c0_26 = arith.constant 0 : index
    %57 = vector.load %arg10[%c0_25, %c0_26] : memref<16x1xf32, #tpu.memory_space<vmem>>, vector<16x1xf32>
    tpu.vector_store %arg10[%c0_25, %c0_26], %56 {strides = array<i32>} : memref<16x1xf32, #tpu.memory_space<vmem>>, vector<16x1xf32>,
    %c1_i32 = arith.constant 1 : i32
    %58 = arith.cmpi eq, %arg1, %c1_i32 : i32
    %59 = arith.extui %58 : i1 to i32
    %c0_i32_27 = arith.constant 0 : i32
    %60 = arith.cmpi ne, %59, %c0_i32_27 : i32
    scf.if %60 {
      %c0_28 = arith.constant 0 : index
      %c0_29 = arith.constant 0 : index
      %61 = vector.load %arg8[%c0_28, %c0_29] : memref<16x1xf32, #tpu.memory_space<vmem>>, vector<16x1xf32>
      %62 = vector.shape_cast %61 : vector<16x1xf32> to vector<1x16x1xf32>
      %cst_30 = arith.constant dense<0.000000e+00> : vector<1xf32>
      %63 = vector.multi_reduction <add>, %62, %cst_30 [1, 2] : vector<1x16x1xf32> to vector<1xf32>
      %64 = vector.shape_cast %63 : vector<1xf32> to vector<1x1x1xf32>
      %65 = vector.extract %64[0, 0, 0] : f32 from vector<1x1x1xf32>
      %c0_31 = arith.constant 0 : index
      %c0_32 = arith.constant 0 : index
      %66 = vector.load %arg9[%c0_31, %c0_32] : memref<16x1xf32, #tpu.memory_space<vmem>>, vector<16x1xf32>
      %67 = vector.shape_cast %66 : vector<16x1xf32> to vector<1x16x1xf32>
      %cst_33 = arith.constant dense<0.000000e+00> : vector<1xf32>
      %68 = vector.multi_reduction <add>, %67, %cst_33 [1, 2] : vector<1x16x1xf32> to vector<1xf32>
      %69 = vector.shape_cast %68 : vector<1xf32> to vector<1x1x1xf32>
      %70 = vector.extract %69[0, 0, 0] : f32 from vector<1x1x1xf32>
      %c0_34 = arith.constant 0 : index
      %c0_35 = arith.constant 0 : index
      %71 = vector.load %arg10[%c0_34, %c0_35] : memref<16x1xf32, #tpu.memory_space<vmem>>, vector<16x1xf32>
      %72 = vector.shape_cast %71 : vector<16x1xf32> to vector<1x16x1xf32>
      %cst_36 = arith.constant dense<0.000000e+00> : vector<1xf32>
      %73 = vector.multi_reduction <add>, %72, %cst_36 [1, 2] : vector<1x16x1xf32> to vector<1xf32>
      %74 = vector.shape_cast %73 : vector<1xf32> to vector<1x1x1xf32>
      %75 = vector.extract %74[0, 0, 0] : f32 from vector<1x1x1xf32>
      %76 = tpu.iota {dimensions = array<i32: 0>} : vector<8x128xi32>
      %c0_i32_37 = arith.constant 0 : i32
      %77 = vector.broadcast %c0_i32_37 : i32 to vector<8x128xi32>
      %78 = arith.cmpi eq, %76, %77 : vector<8x128xi32>
      %c1_i32_38 = arith.constant 1 : i32
      %79 = vector.broadcast %c1_i32_38 : i32 to vector<8x128xi32>
      %80 = arith.cmpi eq, %76, %79 : vector<8x128xi32>
      %c2_i32_39 = arith.constant 2 : i32
      %81 = vector.broadcast %c2_i32_39 : i32 to vector<8x128xi32>
      %82 = arith.cmpi eq, %76, %81 : vector<8x128xi32>
      %cst_40 = arith.constant 0.000000e+00 : f32
      %83 = vector.broadcast %75 : f32 to vector<8x128xf32>
      %84 = vector.broadcast %cst_40 : f32 to vector<8x128xf32>
      %85 = arith.select %82, %83, %84 : vector<8x128xi1>, vector<8x128xf32>
      %86 = vector.broadcast %70 : f32 to vector<8x128xf32>
      %87 = arith.select %80, %86, %85 : vector<8x128xi1>, vector<8x128xf32>
      %88 = vector.broadcast %65 : f32 to vector<8x128xf32>
      %89 = arith.select %78, %88, %87 : vector<8x128xi1>, vector<8x128xf32>
      %c0_41 = arith.constant 0 : index
      %c0_42 = arith.constant 0 : index
      %c0_43 = arith.constant 0 : index
      %90 = vector.load %arg7[%c0_41, %c0_42, %c0_43] : memref<1x8x128xf32, #tpu.memory_space<vmem>>, vector<1x8x128xf32>
      %91 = vector.shape_cast %90 : vector<1x8x128xf32> to vector<8x128xf32>
      %92 = vector.shape_cast %89 : vector<8x128xf32> to vector<1x8x128xf32>
      tpu.vector_store %arg7[%c0_41, %c0_42, %c0_43], %92 {strides = array<i32>} : memref<1x8x128xf32, #tpu.memory_space<vmem>>, vector<1x8x128xf32>,
    } else {
    }
    return
  }
  func.func @transform_0(%arg0: i32, %arg1: i32) -> (i32, i32) {
    %c2_i32 = arith.constant 2 : i32
    %0 = arith.muli %arg0, %c2_i32 : i32
    %1 = arith.addi %0, %arg1 : i32
    %c3_i32 = arith.constant 3 : i32
    %2 = arith.minsi %1, %c3_i32 : i32
    %c0_i32 = arith.constant 0 : i32
    %c0_i32_0 = arith.constant 0 : i32
    return %2, %c0_i32 : i32, i32
  }
  func.func @transform_1(%arg0: i32, %arg1: i32) -> (i32, i32) {
    %c2_i32 = arith.constant 2 : i32
    %0 = arith.muli %arg0, %c2_i32 : i32
    %1 = arith.addi %0, %arg1 : i32
    %c3_i32 = arith.constant 3 : i32
    %2 = arith.minsi %1, %c3_i32 : i32
    %c0_i32 = arith.constant 0 : i32
    %c0_i32_0 = arith.constant 0 : i32
    return %2, %c0_i32 : i32, i32
  }
  func.func @transform_2(%arg0: i32, %arg1: i32) -> (i32, i32) {
    %c2_i32 = arith.constant 2 : i32
    %0 = arith.muli %arg0, %c2_i32 : i32
    %1 = arith.addi %0, %arg1 : i32
    %c3_i32 = arith.constant 3 : i32
    %2 = arith.minsi %1, %c3_i32 : i32
    %c0_i32 = arith.constant 0 : i32
    %c0_i32_0 = arith.constant 0 : i32
    return %2, %c0_i32 : i32, i32
  }
  func.func @transform_3(%arg0: i32, %arg1: i32) -> (i32, i32) {
    %c2_i32 = arith.constant 2 : i32
    %0 = arith.muli %arg0, %c2_i32 : i32
    %1 = arith.addi %0, %arg1 : i32
    %c3_i32 = arith.constant 3 : i32
    %2 = arith.minsi %1, %c3_i32 : i32
    %c0_i32 = arith.constant 0 : i32
    %c0_i32_0 = arith.constant 0 : i32
    return %2, %c0_i32 : i32, i32
  }
  func.func @transform_4(%arg0: i32, %arg1: i32) -> (i32, i32) {
    %c0_i32 = arith.constant 0 : i32
    %c0_i32_0 = arith.constant 0 : i32
    %c0_i32_1 = arith.constant 0 : i32
    return %c0_i32, %c0_i32_0 : i32, i32
  }
  func.func @transform_5(%arg0: i32, %arg1: i32) -> (i32, i32, i32) {
    %c0_i32 = arith.constant 0 : i32
    %c0_i32_0 = arith.constant 0 : i32
    %c0_i32_1 = arith.constant 0 : i32
    return %arg0, %c0_i32, %c0_i32_0 : i32, i32, i32
  }
}

</mosaic_0001>

<llo_original>
// kernel: tpu_custom_call.1
$region0: #{tpu_custom_call.1}
  #allocation0 [shape = 'u32[]', space=smem, size = 0x4, offset = 0x4, fixed_abs, tag = 'smem constant byte address 0x4 - core index']
  #allocation1 [shape = 'u32[144,128]{1,0:T(1,128)}', space=vmem, size = 0x12000, scoped, tag = 'internal scratch']
  #allocation2 [shape = 'f32[16,1]{1,0:T(8,128)}', space=vmem, size = 0x2000, scoped, tag = 'scratch operand']
  #allocation3 [shape = 'f32[16,1]{1,0:T(8,128)}', space=vmem, size = 0x2000, scoped, tag = 'scratch operand']
  #allocation4 [shape = 'f32[16,1]{1,0:T(8,128)}', space=vmem, size = 0x2000, scoped, tag = 'scratch operand']
  %s0 = inlined_call_operand.vmem [shape: f32[64,16], index: 0, kind: input, shape index: {}]
  %s1 = inlined_call_operand.vmem [shape: f32[64,16], index: 1, kind: input, shape index: {}]
  %s2 = inlined_call_operand.vmem [shape: f32[64,16], index: 2, kind: input, shape index: {}]
  %s3 = inlined_call_operand.vmem [shape: s32[64,1], index: 3, kind: input, shape index: {}]
  %s4 = inlined_call_operand.vmem [shape: f32[1,16], index: 4, kind: input, shape index: {}]
  %s5 = inlined_call_operand.hbm [shape: f32[2,8,128], index: 5, kind: output, shape index: {}]
  %s6 = sld [smem:[#allocation0]]
  $region61: #{tpu_custom_call.1} parent=0
    _
  %s8 = ssub.s32 1, %s6
  %s9 = scalar_select 0, %s8, %s6
  $region1: #{tpu_custom_call.1} parent=0
    #allocation5 [shape = 'u8[8192]{0}', space=vmem, size = 0x2000, scoped, tag = 'output window, operand 0']
    #allocation6 [shape = 's32[2]{0}', space=sflag, size = 0x8, scoped, tag = 'scoped memory for tpu_custom_call.1']
    %10 = vsyncpa [#allocation6], 0
    %s11 = scalar_lea.sflag [#allocation6], 1
    %12 = vsyncpa %s11, 0
    loop: start=0, step=1, limit=6
    $region2: #{tpu_custom_call.1} parent=1 // loop_pre_header
      _
    $region3: #{tpu_custom_call.1} parent=1 // loop_header
      %s14 = sphi 0, %s18
      %p15 = scmp.ge.s32.totalorder %s14, 6
      %s21 = sphi 0, %s33
      %s22 = sphi 0, %s29
      %s23 = sphi 0, %s21
      %s24 = sphi 0, %s22
      %s25 = sphi 0, %s23
      %s26 = sphi 0, %s24
      %s44 = sphi 0, %s46
      %s47 = sphi 0, %s44
      %s48 = sphi 0, %s47
      %s64 = sphi 0, %s48
      %s78 = sphi 0, %s80
      %s81 = sphi 0, %s78
      %s82 = sphi 0, %s81
      %s98 = sphi 0, %s82
      %s112 = sphi 0, %s114
      %s115 = sphi 0, %s112
      %s116 = sphi 0, %s115
      %s132 = sphi 0, %s116
      %s146 = sphi 0, %s148
      %s149 = sphi 0, %s146
      %s150 = sphi 0, %s149
      %s166 = sphi 0, %s150
      %s170 = sphi 0, %s170
      %s172 = sphi 0, %s170
      %s173 = sphi 0, %s172
      %s187 = sphi 0, %s173
      %s193 = sphi 0, %s195
      %s196 = sphi 0, %s193
      %s197 = sphi 0, %s196
      %s213 = sphi 0, %s197
    $region4: #{tpu_custom_call.1} parent=1 // loop_header_branch
      %17 = sbr.rel (%p15) target = $region8
    $region5: #{tpu_custom_call.1} parent=1 // loop_body
      %s19 = ssub.s32 %s14, 1
      %s20 = ssub.s32 %s14, 2
      %s27 = sadd.s32 1, %s22
      %p28 = scmp.ge.s32.totalorder %s27, 2
      %s29 = scalar_select %p28, 0, %s27
      %s30 = sadd.s32 1, %s21
      %s31 = scalar_select %p28, %s30, %s21
      %p32 = scmp.ge.s32.totalorder %s31, 2
      %s33 = scalar_select %p32, 0, %s31
      %s34 = smul.u32 %s21, 2
      %s35 = sadd.s32 %s34, %s22
      %p36 = scmp.lt.s32.totalorder %s35, 3
      %s37 = scalar_select %p36, %s35, 3
      %s38 = smul.u32 %s33, 2
      %s39 = sadd.s32 %s38, %s29
      %p40 = scmp.lt.s32.totalorder %s39, 3
      %s41 = scalar_select %p40, %s39, 3
      %s42 = ssub.s32 %s37, %s41
      %p43 = scmp.eq.s32.totalorder %s42, 0
      %s45 = sadd.s32 %s44, 1
      %s46 = scalar_select %p43, %s44, %s45
      %p49 = pneg %p43
      %p50 = scmp.eq.s32.totalorder %s14, 3
      %p51 = por %p49, %p50
      %p52 = scmp.ne.s32.totalorder %s44, %s47
      %p53 = scmp.eq.s32.totalorder %s14, 0
      %p54 = por %p52, %p53
      %p55 = scmp.ne.s32.totalorder %s44, %s47
      %p56 = scmp.eq.s32.totalorder %s19, 3
      %p57 = por %p55, %p56
      %p58 = scmp.ne.s32.totalorder %s47, %s48
      %p59 = scmp.eq.s32.totalorder %s19, 0
      %p60 = por %p58, %p59
      %p61 = scmp.ne.s32.totalorder %s47, %s48
      %p62 = scmp.eq.s32.totalorder %s20, 3
      %p63 = por %p61, %p62
      %p65 = scmp.ne.s32.totalorder %s48, %s64
      %p66 = scmp.eq.s32.totalorder %s20, 0
      %p67 = por %p65, %p66
      %s68 = smul.u32 %s21, 2
      %s69 = sadd.s32 %s68, %s22
      %p70 = scmp.lt.s32.totalorder %s69, 3
      %s71 = scalar_select %p70, %s69, 3
      %s72 = smul.u32 %s33, 2
      %s73 = sadd.s32 %s72, %s29
      %p74 = scmp.lt.s32.totalorder %s73, 3
      %s75 = scalar_select %p74, %s73, 3
      %s76 = ssub.s32 %s71, %s75
      %p77 = scmp.eq.s32.totalorder %s76, 0
      %s79 = sadd.s32 %s78, 1
      %s80 = scalar_select %p77, %s78, %s79
      %p83 = pneg %p77
      %p84 = scmp.eq.s32.totalorder %s14, 3
      %p85 = por %p83, %p84
      %p86 = scmp.ne.s32.totalorder %s78, %s81
      %p87 = scmp.eq.s32.totalorder %s14, 0
      %p88 = por %p86, %p87
      %p89 = scmp.ne.s32.totalorder %s78, %s81
      %p90 = scmp.eq.s32.totalorder %s19, 3
      %p91 = por %p89, %p90
      %p92 = scmp.ne.s32.totalorder %s81, %s82
      %p93 = scmp.eq.s32.totalorder %s19, 0
      %p94 = por %p92, %p93
      %p95 = scmp.ne.s32.totalorder %s81, %s82
      %p96 = scmp.eq.s32.totalorder %s20, 3
      %p97 = por %p95, %p96
      %p99 = scmp.ne.s32.totalorder %s82, %s98
      %p100 = scmp.eq.s32.totalorder %s20, 0
      %p101 = por %p99, %p100
      %s102 = smul.u32 %s21, 2
      %s103 = sadd.s32 %s102, %s22
      %p104 = scmp.lt.s32.totalorder %s103, 3
      %s105 = scalar_select %p104, %s103, 3
      %s106 = smul.u32 %s33, 2
      %s107 = sadd.s32 %s106, %s29
      %p108 = scmp.lt.s32.totalorder %s107, 3
      %s109 = scalar_select %p108, %s107, 3
      %s110 = ssub.s32 %s105, %s109
      %p111 = scmp.eq.s32.totalorder %s110, 0
      %s113 = sadd.s32 %s112, 1
      %s114 = scalar_select %p111, %s112, %s113
      %p117 = pneg %p111
      %p118 = scmp.eq.s32.totalorder %s14, 3
      %p119 = por %p117, %p118
      %p120 = scmp.ne.s32.totalorder %s112, %s115
      %p121 = scmp.eq.s32.totalorder %s14, 0
      %p122 = por %p120, %p121
      %p123 = scmp.ne.s32.totalorder %s112, %s115
      %p124 = scmp.eq.s32.totalorder %s19, 3
      %p125 = por %p123, %p124
      %p126 = scmp.ne.s32.totalorder %s115, %s116
      %p127 = scmp.eq.s32.totalorder %s19, 0
      %p128 = por %p126, %p127
      %p129 = scmp.ne.s32.totalorder %s115, %s116
      %p130 = scmp.eq.s32.totalorder %s20, 3
      %p131 = por %p129, %p130
      %p133 = scmp.ne.s32.totalorder %s116, %s132
      %p134 = scmp.eq.s32.totalorder %s20, 0
      %p135 = por %p133, %p134
      %s136 = smul.u32 %s21, 2
      %s137 = sadd.s32 %s136, %s22
      %p138 = scmp.lt.s32.totalorder %s137, 3
      %s139 = scalar_select %p138, %s137, 3
      %s140 = smul.u32 %s33, 2
      %s141 = sadd.s32 %s140, %s29
      %p142 = scmp.lt.s32.totalorder %s141, 3
      %s143 = scalar_select %p142, %s141, 3
      %s144 = ssub.s32 %s139, %s143
      %p145 = scmp.eq.s32.totalorder %s144, 0
      %s147 = sadd.s32 %s146, 1
      %s148 = scalar_select %p145, %s146, %s147
      %p151 = pneg %p145
      %p152 = scmp.eq.s32.totalorder %s14, 3
      %p153 = por %p151, %p152
      %p154 = scmp.ne.s32.totalorder %s146, %s149
      %p155 = scmp.eq.s32.totalorder %s14, 0
      %p156 = por %p154, %p155
      %p157 = scmp.ne.s32.totalorder %s146, %s149
      %p158 = scmp.eq.s32.totalorder %s19, 3
      %p159 = por %p157, %p158
      %p160 = scmp.ne.s32.totalorder %s149, %s150
      %p161 = scmp.eq.s32.totalorder %s19, 0
      %p162 = por %p160, %p161
      %p163 = scmp.ne.s32.totalorder %s149, %s150
      %p164 = scmp.eq.s32.totalorder %s20, 3
      %p165 = por %p163, %p164
      %p167 = scmp.ne.s32.totalorder %s150, %s166
      %p168 = scmp.eq.s32.totalorder %s20, 0
      %p169 = por %p167, %p168
      %s171 = sadd.s32 %s170, 1
      %p174 = scmp.eq.s32.totalorder %s14, 3
      %p175 = scmp.ne.s32.totalorder %s170, %s172
      %p176 = scmp.eq.s32.totalorder %s14, 0
      %p177 = por %p175, %p176
      %p178 = scmp.ne.s32.totalorder %s170, %s172
      %p179 = scmp.eq.s32.totalorder %s19, 3
      %p180 = por %p178, %p179
      %p181 = scmp.ne.s32.totalorder %s172, %s173
      %p182 = scmp.eq.s32.totalorder %s19, 0
      %p183 = por %p181, %p182
      %p184 = scmp.ne.s32.totalorder %s172, %s173
      %p185 = scmp.eq.s32.totalorder %s20, 3
      %p186 = por %p184, %p185
      %p188 = scmp.ne.s32.totalorder %s173, %s187
      %p189 = scmp.eq.s32.totalorder %s20, 0
      %p190 = por %p188, %p189
      %s191 = ssub.s32 %s21, %s33
      %p192 = scmp.eq.s32.totalorder %s191, 0
      %s194 = sadd.s32 %s193, 1
      %s195 = scalar_select %p192, %s193, %s194
      %p198 = pneg %p192
      %p199 = scmp.eq.s32.totalorder %s14, 3
      %p200 = por %p198, %p199
      %p201 = scmp.ne.s32.totalorder %s193, %s196
      %p202 = scmp.eq.s32.totalorder %s14, 0
      %p203 = por %p201, %p202
      %p204 = scmp.ne.s32.totalorder %s193, %s196
      %p205 = scmp.eq.s32.totalorder %s19, 3
      %p206 = por %p204, %p205
      %p207 = scmp.ne.s32.totalorder %s196, %s197
      %p208 = scmp.eq.s32.totalorder %s19, 0
      %p209 = por %p207, %p208
      %p210 = scmp.ne.s32.totalorder %s196, %s197
      %p211 = scmp.eq.s32.totalorder %s20, 3
      %p212 = por %p210, %p211
      %p214 = scmp.ne.s32.totalorder %s197, %s213
      %p215 = scmp.eq.s32.totalorder %s20, 0
      %p216 = por %p214, %p215
      %p217 = scmp.le.s32.totalorder 1, %s14
      %p218 = scmp.lt.s32.totalorder %s14, 5
      %p219 = pnand %p217, %p218
      %p220 = pneg %p219
      // Predicated region
      $region9: #{tpu_custom_call.1} parent=5 // pred_check
        _
      $region10: #{tpu_custom_call.1} parent=5 // pred_check_branch
        %222 = sbr.rel (%p219) target = $region12
      $region11: #{tpu_custom_call.1} parent=5 // pred_region
        %s223 = ssub.s32 %s14, 1
        // Predicated region
        $region13: #{tpu_custom_call.1} parent=11 // pred_check
          %p224 = pneg %p183
        $region14: #{tpu_custom_call.1} parent=11 // pred_check_branch
          %226 = sbr.rel (%p224) target = $region16
        $region15: #{tpu_custom_call.1} parent=11 // pred_region
          _
        $region16: #{tpu_custom_call.1} parent=11 // pred_fallthru
          _
      $region12: #{tpu_custom_call.1} parent=5 // pred_fallthru
        _
      %p227 = scmp.lt.s32.totalorder %s14, 4
      // Predicated region
      $region17: #{tpu_custom_call.1} parent=5 // pred_check
        %p228 = pneg %p227
      $region18: #{tpu_custom_call.1} parent=5 // pred_check_branch
        %230 = sbr.rel (%p228) target = $region20
      $region19: #{tpu_custom_call.1} parent=5 // pred_region
        // Predicated region
        $region21: #{tpu_custom_call.1} parent=19 // pred_check
          %p231 = pneg %p54
        $region22: #{tpu_custom_call.1} parent=19 // pred_check_branch
          %233 = sbr.rel (%p231) target = $region24
        $region23: #{tpu_custom_call.1} parent=19 // pred_region
          %s234 = smul.u32 %s21, 2
          %s235 = sadd.s32 %s234, %s22
          %p236 = scmp.lt.s32.totalorder %s235, 3
          %s237 = scalar_select %p236, %s235, 3
          %s238 = smul.u32 2, %s237
          %p239 = scmp.lt.s32.totalorder %s238, 7
          %s240 = scalar_select %p239, %s238, 7
          %s241 = smul.addr %s240, 8
          %s242 = scalar_lea.vmem %s0, %s241
          %s243 = smul.u32 %s21, 2
          %s244 = sadd.s32 %s243, %s22
          %p245 = scmp.lt.s32.totalorder %s244, 3
          %s246 = scalar_select %p245, %s244, 3
          %s247 = smul.u32 2, %s246
        $region24: #{tpu_custom_call.1} parent=19 // pred_fallthru
          _
        // Predicated region
        $region25: #{tpu_custom_call.1} parent=19 // pred_check
          %p248 = pneg %p88
        $region26: #{tpu_custom_call.1} parent=19 // pred_check_branch
          %250 = sbr.rel (%p248) target = $region28
        $region27: #{tpu_custom_call.1} parent=19 // pred_region
          %s251 = smul.u32 %s21, 2
          %s252 = sadd.s32 %s251, %s22
          %p253 = scmp.lt.s32.totalorder %s252, 3
          %s254 = scalar_select %p253, %s252, 3
          %s255 = smul.u32 2, %s254
          %p256 = scmp.lt.s32.totalorder %s255, 7
          %s257 = scalar_select %p256, %s255, 7
          %s258 = smul.addr %s257, 8
          %s259 = scalar_lea.vmem %s1, %s258
          %s260 = smul.u32 %s21, 2
          %s261 = sadd.s32 %s260, %s22
          %p262 = scmp.lt.s32.totalorder %s261, 3
          %s263 = scalar_select %p262, %s261, 3
          %s264 = smul.u32 2, %s263
        $region28: #{tpu_custom_call.1} parent=19 // pred_fallthru
          _
        // Predicated region
        $region29: #{tpu_custom_call.1} parent=19 // pred_check
          %p265 = pneg %p122
        $region30: #{tpu_custom_call.1} parent=19 // pred_check_branch
          %267 = sbr.rel (%p265) target = $region32
        $region31: #{tpu_custom_call.1} parent=19 // pred_region
          %s268 = smul.u32 %s21, 2
          %s269 = sadd.s32 %s268, %s22
          %p270 = scmp.lt.s32.totalorder %s269, 3
          %s271 = scalar_select %p270, %s269, 3
          %s272 = smul.u32 2, %s271
          %p273 = scmp.lt.s32.totalorder %s272, 7
          %s274 = scalar_select %p273, %s272, 7
          %s275 = smul.addr %s274, 8
          %s276 = scalar_lea.vmem %s2, %s275
          %s277 = smul.u32 %s21, 2
          %s278 = sadd.s32 %s277, %s22
          %p279 = scmp.lt.s32.totalorder %s278, 3
          %s280 = scalar_select %p279, %s278, 3
          %s281 = smul.u32 2, %s280
        $region32: #{tpu_custom_call.1} parent=19 // pred_fallthru
          _
        // Predicated region
        $region33: #{tpu_custom_call.1} parent=19 // pred_check
          %p282 = pneg %p156
        $region34: #{tpu_custom_call.1} parent=19 // pred_check_branch
          %284 = sbr.rel (%p282) target = $region36
        $region35: #{tpu_custom_call.1} parent=19 // pred_region
          %s285 = smul.u32 %s21, 2
          %s286 = sadd.s32 %s285, %s22
          %p287 = scmp.lt.s32.totalorder %s286, 3
          %s288 = scalar_select %p287, %s286, 3
          %s289 = smul.u32 2, %s288
          %p290 = scmp.lt.s32.totalorder %s289, 7
          %s291 = scalar_select %p290, %s289, 7
          %s292 = smul.addr %s291, 8
          %s293 = scalar_lea.vmem %s3, %s292
          %s294 = smul.u32 %s21, 2
          %s295 = sadd.s32 %s294, %s22
          %p296 = scmp.lt.s32.totalorder %s295, 3
          %s297 = scalar_select %p296, %s295, 3
          %s298 = smul.u32 2, %s297
        $region36: #{tpu_custom_call.1} parent=19 // pred_fallthru
          _
      $region20: #{tpu_custom_call.1} parent=5 // pred_fallthru
        _
      %p299 = scmp.le.s32.totalorder 1, %s14
      %p300 = scmp.lt.s32.totalorder %s14, 5
      %p301 = pnand %p299, %p300
      %p302 = pneg %p301
      // Predicated region
      $region37: #{tpu_custom_call.1} parent=5 // pred_check
        _
      $region38: #{tpu_custom_call.1} parent=5 // pred_check_branch
        %304 = sbr.rel (%p301) target = $region40
      $region39: #{tpu_custom_call.1} parent=5 // pred_region
        %s305 = ssub.s32 %s14, 1
        %s306 = smul.u32 %s23, 2
        %s307 = sadd.s32 %s306, %s24
        %p308 = scmp.lt.s32.totalorder %s307, 3
        %s309 = scalar_select %p308, %s307, 3
        %s310 = smul.u32 2, %s309
        %p311 = scmp.lt.s32.totalorder %s310, 7
        %s312 = scalar_select %p311, %s310, 7
        %s313 = smul.addr %s312, 8
        %s314 = scalar_lea.vmem %s0, %s313
        %p315 = pneg %p60
        %p316 = pneg %p57
        %s317 = smul.u32 %s23, 2
        %s318 = sadd.s32 %s317, %s24
        %p319 = scmp.lt.s32.totalorder %s318, 3
        %s320 = scalar_select %p319, %s318, 3
        %s321 = smul.u32 2, %s320
        %p322 = scmp.lt.s32.totalorder %s321, 7
        %s323 = scalar_select %p322, %s321, 7
        %s324 = smul.addr %s323, 8
        %s325 = scalar_lea.vmem %s1, %s324
        %p326 = pneg %p94
        %p327 = pneg %p91
        %s328 = smul.u32 %s23, 2
        %s329 = sadd.s32 %s328, %s24
        %p330 = scmp.lt.s32.totalorder %s329, 3
        %s331 = scalar_select %p330, %s329, 3
        %s332 = smul.u32 2, %s331
        %p333 = scmp.lt.s32.totalorder %s332, 7
        %s334 = scalar_select %p333, %s332, 7
        %s335 = smul.addr %s334, 8
        %s336 = scalar_lea.vmem %s2, %s335
        %p337 = pneg %p128
        %p338 = pneg %p125
        %s339 = smul.u32 %s23, 2
        %s340 = sadd.s32 %s339, %s24
        %p341 = scmp.lt.s32.totalorder %s340, 3
        %s342 = scalar_select %p341, %s340, 3
        %s343 = smul.u32 2, %s342
        %p344 = scmp.lt.s32.totalorder %s343, 7
        %s345 = scalar_select %p344, %s343, 7
        %s346 = smul.addr %s345, 8
        %s347 = scalar_lea.vmem %s3, %s346
        %p348 = pneg %p162
        %p349 = pneg %p159
        %p350 = pneg %p183
        %p351 = pneg %p180
        %p352 = pneg %p209
        %p353 = pneg %p206
        %s354 = sand.u32 %s196, 1
        %s355 = scalar_lea.sflag [#allocation6], %s354
        %s356 = sand.u32 %s196, 1
        %s357 = smul.addr %s356, 8
        %s358 = scalar_lea.vmem [#allocation5], %s357
        %s359 = smul.u32 %s23, 2
        %s360 = sadd.s32 %s359, %s24
        %p361 = scmp.lt.s32.totalorder %s360, 3
        %s362 = scalar_select %p361, %s360, 3
        %s363 = smul.u32 2, %s362
        %p364 = scmp.lt.s32.totalorder %s363, 7
        %s365 = scalar_select %p364, %s363, 7
        %s366 = smul.addr %s365, 8
        %s367 = scalar_lea.vmem %s0, %s366
        %s368 = smul.u32 %s23, 2
        %s369 = sadd.s32 %s368, %s24
        %p370 = scmp.lt.s32.totalorder %s369, 3
        %s371 = scalar_select %p370, %s369, 3
        %s372 = smul.u32 2, %s371
        %s373 = smul.u32 %s23, 2
        %s374 = sadd.s32 %s373, %s24
        %p375 = scmp.lt.s32.totalorder %s374, 3
        %s376 = scalar_select %p375, %s374, 3
        %s377 = smul.u32 2, %s376
        %p378 = scmp.lt.s32.totalorder %s377, 7
        %s379 = scalar_select %p378, %s377, 7
        %s380 = smul.addr %s379, 8
        %s381 = scalar_lea.vmem %s1, %s380
        %s382 = smul.u32 %s23, 2
        %s383 = sadd.s32 %s382, %s24
        %p384 = scmp.lt.s32.totalorder %s383, 3
        %s385 = scalar_select %p384, %s383, 3
        %s386 = smul.u32 2, %s385
        %s387 = smul.u32 %s23, 2
        %s388 = sadd.s32 %s387, %s24
        %p389 = scmp.lt.s32.totalorder %s388, 3
        %s390 = scalar_select %p389, %s388, 3
        %s391 = smul.u32 2, %s390
        %p392 = scmp.lt.s32.totalorder %s391, 7
        %s393 = scalar_select %p392, %s391, 7
        %s394 = smul.addr %s393, 8
        %s395 = scalar_lea.vmem %s2, %s394
        %s396 = smul.u32 %s23, 2
        %s397 = sadd.s32 %s396, %s24
        %p398 = scmp.lt.s32.totalorder %s397, 3
        %s399 = scalar_select %p398, %s397, 3
        %s400 = smul.u32 2, %s399
        %s401 = smul.u32 %s23, 2
        %s402 = sadd.s32 %s401, %s24
        %p403 = scmp.lt.s32.totalorder %s402, 3
        %s404 = scalar_select %p403, %s402, 3
        %s405 = smul.u32 2, %s404
        %p406 = scmp.lt.s32.totalorder %s405, 7
        %s407 = scalar_select %p406, %s405, 7
        %s408 = smul.addr %s407, 8
        %s409 = scalar_lea.vmem %s3, %s408
        %s410 = smul.u32 %s23, 2
        %s411 = sadd.s32 %s410, %s24
        %p412 = scmp.lt.s32.totalorder %s411, 3
        %s413 = scalar_select %p412, %s411, 3
        %s414 = smul.u32 2, %s413
        %p415 = scmp.eq.s32.totalorder %s24, 0
        // Predicated region
        $region41: #{tpu_custom_call.1} parent=39 // pred_check
          %p416 = pneg %p415
        $region42: #{tpu_custom_call.1} parent=39 // pred_check_branch
          %418 = sbr.rel (%p416) target = $region44
        $region43: #{tpu_custom_call.1} parent=39 // pred_region
          %vm419 = vcmask 7168
          %420 = vst.msk [vmem:[#allocation2] sm:$0xff] %vm419, 0.0
          %421 = vst.msk [vmem:[#allocation2 + $0x8] sm:$0xff] %vm419, 0.0
          %422 = vst.msk [vmem:[#allocation3] sm:$0xff] %vm419, 0.0
          %423 = vst.msk [vmem:[#allocation3 + $0x8] sm:$0xff] %vm419, 0.0
          %424 = vst.msk [vmem:[#allocation4] sm:$0xff] %vm419, 0.0
          %425 = vst.msk [vmem:[#allocation4 + $0x8] sm:$0xff] %vm419, 0.0
        $region44: #{tpu_custom_call.1} parent=39 // pred_fallthru
          _
        %v426 = vld [vmem:[%s367] sm:$0xff]
        %v427 = vld [vmem:[%s367 + $0x8] sm:$0xff]
        %v428 = vld [vmem:[%s381] sm:$0xff]
        %v429 = vld [vmem:[%s381 + $0x8] sm:$0xff]
        %v430 = vld [vmem:[%s395] sm:$0xff]
        %v431 = vld [vmem:[%s395 + $0x8] sm:$0xff]
        %v432 = vld [vmem:[%s409] sm:$0xff]
        %v433 = vld [vmem:[%s409 + $0x8] sm:$0xff]
        %v434 = vld [vmem:[%s4] sm:$0x1]
        %s435 = smul.u32 %s23, 2
        %s436 = sadd.s32 %s435, %s24
        %s437 = smul.u32 %s436, 16
        %v438 = vlaneseq
        %v439 = vshrl.u32 %v438, 7
        %v440 = vadd.s32 %v439, 8
        %v441 = vstv %s437
        %v442 = vadd.s32 %v441, %v439
        %v443 = vadd.s32 %v441, %v440
        %vm444 = vcmp.lt.s32.totalorder %v442, 64
        %vm445 = vcmp.lt.s32.totalorder %v443, 64
        %vm446 = vcmask 130048
        %v447 = vsel %vm446, %v426, -inf
        %448 = vmax.xlane.f32.xlu0 %v447
        %v449 = vpop.xlane.xlu0 %448
        %v450 = vsel %vm446, %v427, -inf
        %451 = vmax.xlane.f32.xlu0 %v450
        %v452 = vpop.xlane.xlu0 %451
        %v453 = vsub.f32 %v426, %v449
        %v454 = vsub.f32 %v427, %v452
        %v455 = vmul.f32 %v453, 1.442695
        %v456 = vpow.pop %v455
        %v457 = vmul.f32 %v454, 1.442695
        %v458 = vpow.pop %v457
        %v459 = vsel %vm446, %v456, 0.0
        %460 = vadd.xlane.f32.xlu0 %v459
        %v461 = vpop.xlane.xlu0 %460
        %v462 = vsel %vm446, %v458, 0.0
        %463 = vadd.xlane.f32.xlu0 %v462
        %v464 = vpop.xlane.xlu0 %463
        %v465 = vlog2.pop %v461
        %v466 = vmul.f32 %v465, 0.6931472
        %v467 = vlog2.pop %v464
        %v468 = vmul.f32 %v467, 0.6931472
        %v469 = vlaneseq
        %v470 = vand.u32 %v469, 127
        %471 = vset.pattern.permute.xlu0 0
        %472 = vperm.xlu0 %471, %v432
        %v473 = vpop.permute.xlu0 %472
        %474 = vset.pattern.permute.xlu0 0
        %475 = vperm.xlu0 %474, %v433
        %v476 = vpop.permute.xlu0 %475
        %vm477 = vcmp.eq.s32.totalorder %v470, %v473
        %vm478 = vcmp.eq.s32.totalorder %v470, %v476
        %v479 = vsel %vm477, 1, 0
        %v480 = vsel %vm478, 1, 0
        %v481 = vcvt.s32.f32 %v479
        %v482 = vcvt.s32.f32 %v480
        %v483 = vmul.f32 %v481, %v453
        %v484 = vmul.f32 %v482, %v454
        %v485 = vsel %vm446, %v483, 0.0
        %486 = vadd.xlane.f32.xlu0 %v485
        %v487 = vpop.xlane.xlu0 %486
        %v488 = vsel %vm446, %v484, 0.0
        %489 = vadd.xlane.f32.xlu0 %v488
        %v490 = vpop.xlane.xlu0 %489
        %v492 = vlaneseq
        %v493 = vshrl.u32 %v492, 7
        %v494 = vsub.s32 0, %v493
        %v495 = vrot.slane %v434, %v494
        %v497 = vmul.f32 %v481, %v495
        %v498 = vmul.f32 %v482, %v495
        %v499 = vsel %vm446, %v497, 0.0
        %500 = vadd.xlane.f32.xlu0 %v499
        %v501 = vpop.xlane.xlu0 %500
        %v502 = vsel %vm446, %v498, 0.0
        %503 = vadd.xlane.f32.xlu0 %v502
        %v504 = vpop.xlane.xlu0 %503
        %v505 = vsub.f32 %v466, %v487
        %v506 = vsub.f32 %v468, %v490
        %v507 = vmul.f32 %v501, %v505
        %v508 = vmul.f32 %v504, %v506
        %v509 = vsub.f32 %v426, %v428
        %v510 = vsub.f32 %v427, %v429
        %v511 = vsub.f32 %v426, %v430
        %v512 = vsub.f32 %v427, %v431
        %v513 = vmul.f32 %v509, %v509
        %v514 = vmul.f32 %v510, %v510
        %v515 = vmul.f32 %v511, %v511
        %v516 = vmul.f32 %v512, %v512
        %v517 = vadd.f32 %v513, %v515
        %v518 = vadd.f32 %v514, %v516
        %v519 = vsel %vm446, %v517, 0.0
        %520 = vadd.xlane.f32.xlu0 %v519
        %v521 = vpop.xlane.xlu0 %520
        %v522 = vsel %vm446, %v518, 0.0
        %523 = vadd.xlane.f32.xlu0 %v522
        %v524 = vpop.xlane.xlu0 %523
        %v525 = vld [vmem:[#allocation2] sm:$0xff]
        %v526 = vld [vmem:[#allocation2 + $0x8] sm:$0xff]
        %v527 = vsel %vm444, %v507, 0.0
        %v528 = vsel %vm445, %v508, 0.0
        %v529 = vadd.f32 %v525, %v527
        %v530 = vadd.f32 %v526, %v528
        %vm531 = vcmask 7168
        %532 = vst.msk [vmem:[#allocation2] sm:$0xff] %vm531, %v529
        %533 = vst.msk [vmem:[#allocation2 + $0x8] sm:$0xff] %vm531, %v530
        %v534 = vld [vmem:[#allocation3] sm:$0xff]
        %v535 = vld [vmem:[#allocation3 + $0x8] sm:$0xff]
        %v536 = vsel %vm444, %v501, 0.0
        %v537 = vsel %vm445, %v504, 0.0
        %v538 = vadd.f32 %v534, %v536
        %v539 = vadd.f32 %v535, %v537
        %540 = vst.msk [vmem:[#allocation3] sm:$0xff] %vm531, %v538
        %541 = vst.msk [vmem:[#allocation3 + $0x8] sm:$0xff] %vm531, %v539
        %v542 = vld [vmem:[#allocation4] sm:$0xff]
        %v543 = vld [vmem:[#allocation4 + $0x8] sm:$0xff]
        %v544 = vsel %vm444, %v521, 0.0
        %v545 = vsel %vm445, %v524, 0.0
        %v546 = vadd.f32 %v542, %v544
        %v547 = vadd.f32 %v543, %v545
        %548 = vst.msk [vmem:[#allocation4] sm:$0xff] %vm531, %v546
        %549 = vst.msk [vmem:[#allocation4 + $0x8] sm:$0xff] %vm531, %v547
        %p550 = scmp.eq.s32.totalorder %s24, 1
        // Predicated region
        $region45: #{tpu_custom_call.1} parent=39 // pred_check
          %p551 = pneg %p550
        $region46: #{tpu_custom_call.1} parent=39 // pred_check_branch
          %553 = sbr.rel (%p551) target = $region48
        $region47: #{tpu_custom_call.1} parent=39 // pred_region
          %v554 = vld [vmem:[#allocation2] sm:$0xff]
          %v555 = vld [vmem:[#allocation2 + $0x8] sm:$0xff]
          %v556 = vsel %vm531, %v554, 0.0
          %v557 = vsel %vm531, %v555, 0.0
          %v558 = vadd.f32 %v556, %v557
          %559 = vadd.xlane.f32.xlu0 %v558
          %v560 = vpop.xlane.xlu0 %559
          %v561 = vrot.slane %v560, 4
          %v562 = vadd.f32 %v560, %v561
          %v563 = vrot.slane %v562, 2
          %v564 = vadd.f32 %v562, %v563
          %v565 = vrot.slane %v564, 1
          %v566 = vadd.f32 %v564, %v565
          %s567 = vtos %v566
          %v568 = vld [vmem:[#allocation3] sm:$0xff]
          %v569 = vld [vmem:[#allocation3 + $0x8] sm:$0xff]
          %v570 = vsel %vm531, %v568, 0.0
          %v571 = vsel %vm531, %v569, 0.0
          %v572 = vadd.f32 %v570, %v571
          %573 = vadd.xlane.f32.xlu0 %v572
          %v574 = vpop.xlane.xlu0 %573
          %v575 = vrot.slane %v574, 4
          %v576 = vadd.f32 %v574, %v575
          %v577 = vrot.slane %v576, 2
          %v578 = vadd.f32 %v576, %v577
          %v579 = vrot.slane %v578, 1
          %v580 = vadd.f32 %v578, %v579
          %s581 = vtos %v580
          %v582 = vld [vmem:[#allocation4] sm:$0xff]
          %v583 = vld [vmem:[#allocation4 + $0x8] sm:$0xff]
          %v584 = vsel %vm531, %v582, 0.0
          %v585 = vsel %vm531, %v583, 0.0
          %v586 = vadd.f32 %v584, %v585
          %587 = vadd.xlane.f32.xlu0 %v586
          %v588 = vpop.xlane.xlu0 %587
          %v589 = vrot.slane %v588, 4
          %v590 = vadd.f32 %v588, %v589
          %v591 = vrot.slane %v590, 2
          %v592 = vadd.f32 %v590, %v591
          %v593 = vrot.slane %v592, 1
          %v594 = vadd.f32 %v592, %v593
          %s595 = vtos %v594
          %vm596 = vcmp.eq.s32.totalorder %v439, 0
          %vm597 = vcmp.eq.s32.totalorder %v439, 1
          %vm598 = vcmp.eq.s32.totalorder %v439, 2
          %v599 = vstv %s595
          %v600 = vsel %vm598, %v599, 0.0
          %v601 = vstv %s581
          %v602 = vsel %vm597, %v601, %v600
          %v603 = vstv %s567
          %v604 = vsel %vm596, %v603, %v602
          %605 = vst [vmem:[%s358] sm:$0xff] %v604
        $region48: #{tpu_custom_call.1} parent=39 // pred_fallthru
          _
        %s606 = sand.u32 %s196, 1
        %s607 = scalar_lea.sflag [#allocation6], %s606
        %s608 = sand.u32 %s196, 1
        %s609 = smul.addr %s608, 8
        %s610 = scalar_lea.vmem [#allocation5], %s609
        // Predicated region
        $region49: #{tpu_custom_call.1} parent=39 // pred_check
          %p611 = pneg %p206
        $region50: #{tpu_custom_call.1} parent=39 // pred_check_branch
          %613 = sbr.rel (%p611) target = $region52
        $region51: #{tpu_custom_call.1} parent=39 // pred_region
          %s615 = ssub.s32 128, 128
          %616 = vsyncadd %s607, %s615
          %s617 = smul.addr %s23, 128
          %s618 = scalar_lea.hbm %s5, %s617
          %s620 = sshll.u32 %s610, 4
          %s621 = int_to_ptr.vmem [resolvable:$true] %s620
          %623 = dma.vmem_to_hbm [thread:$0]  %s621, 128, %s618, %s607
        $region52: #{tpu_custom_call.1} parent=39 // pred_fallthru
          _
      $region40: #{tpu_custom_call.1} parent=5 // pred_fallthru
        _
      %p624 = scmp.le.s32.totalorder 2, %s14
      // Predicated region
      $region53: #{tpu_custom_call.1} parent=5 // pred_check
        %p625 = pneg %p624
      $region54: #{tpu_custom_call.1} parent=5 // pred_check_branch
        %627 = sbr.rel (%p625) target = $region56
      $region55: #{tpu_custom_call.1} parent=5 // pred_region
        %s628 = ssub.s32 %s14, 2
        // Predicated region
        $region57: #{tpu_custom_call.1} parent=55 // pred_check
          %p629 = pneg %p212
        $region58: #{tpu_custom_call.1} parent=55 // pred_check_branch
          %631 = sbr.rel (%p629) target = $region60
        $region59: #{tpu_custom_call.1} parent=55 // pred_region
          %s632 = sand.u32 %s197, 1
          %s633 = scalar_lea.sflag [#allocation6], %s632
          %s634 = sand.u32 %s197, 1
          %s635 = smul.addr %s634, 8
          %s636 = scalar_lea.vmem [#allocation5], %s635
          %637 = dma.done %s633, 128
        $region60: #{tpu_custom_call.1} parent=55 // pred_fallthru
          _
      $region56: #{tpu_custom_call.1} parent=5 // pred_fallthru
        _
    $region6: #{tpu_custom_call.1} parent=1 // loop_footer
      %s18 = sadd.s32 1, %s14
    $region7: #{tpu_custom_call.1} parent=1 // loop_footer_branch
      %13 = sbr.rel target = $region3
    $region8: #{tpu_custom_call.1} parent=1 // loop_exit
      _
    %638 = vsyncpa [#allocation6], 1
    %s639 = scalar_lea.sflag [#allocation6], 1
    %640 = vsyncpa %s639, 1

</llo_original>
